<compile_context>
chip_gen: v6e
topology: v6e:2x2x1
jax: 0.10.0
libtpu: 0.0.40
codegen_flags: <defaults>
</compile_context>

<pallas_src>
import functools

import jax
import jax.numpy as jnp
from jax.experimental import pallas as pl
from jax.experimental.pallas import tpu as pltpu


_VMEM_LIMIT_BYTES = 32 * 1024 * 1024    # safe scoped limit on v5e/v6e (128 MiB) and v7x (64 MiB)
_VMEM_TILE_BUDGET = 24 * 1024 * 1024    # headroom below the limit for pipeline buffers + temps
_TARGET_BLOCK_BYTES = 2 * 1024 * 1024   # ~2 MiB input blocks amortize the ~0.35us/step overhead


def _round_up(x, m):
    return ((x + m - 1) // m) * m


def _choose_tiles(n, c, hw, dtype, norm_only):
    """Pick (Nb, T, n_hw): batch fold, lane tile (multiple of 128 or full HW), HW-grid extent."""
    itemsize = jnp.dtype(dtype).itemsize
    # sublane padding of the C axis in VMEM (8 for 4B, 16 for 2B, 32 for 1B dtypes)
    sublane = {4: 8, 2: 16, 1: 32}.get(itemsize, 8)
    c_pad = _round_up(max(c, 1), sublane)
    # norm-only output block is a single sublane row, not C-wide
    out_pad = sublane if norm_only else c_pad
    # per-lane VMEM bytes: double-buffered input + double-buffered output + f32 temps
    bytes_per_lane = 2 * c_pad * itemsize + 2 * out_pad * itemsize + c_pad * 4 + 8
    lane_cap = max(128, (_VMEM_TILE_BUDGET // bytes_per_lane) // 128 * 128)

    # ---- lane (HW) tiling ----
    if hw <= lane_cap:
        t, n_hw = hw, 1                          # full extent: always a legal block shape
    else:
        t = lane_cap
        if hw % 128 == 0:
            # prefer a 128-multiple that divides HW evenly (no ragged last tile)
            while t >= 128 and hw % t != 0:
                t -= 128
            if t < 128:
                t = lane_cap                      # no clean divisor: ragged last tile
        n_hw = pl.cdiv(hw, t)                     # ragged last block is lane-masked by Pallas

    # ---- batch folding: grow the block along N until it is ~_TARGET_BLOCK_BYTES ----
    nb = 1
    if n_hw == 1 and n > 1:
        blk_bytes_per_batch = max(1, c_pad * t * itemsize)
        want = max(1, -(-_TARGET_BLOCK_BYTES // blk_bytes_per_batch))        # ceil
        vmem_cap = max(1, _VMEM_TILE_BUDGET // max(1, bytes_per_lane * t))
        nb_cap = min(n, want, vmem_cap)
        nb_cap = min(nb_cap, max(1, n // 2))      # keep >=2 grid steps (v7x megacore)
        for d in range(max(1, nb_cap), 0, -1):    # largest divisor of n (no ragged batch block)
            if n % d == 0:
                nb = d
                break

    # ---- degenerate single-step grid with N == 1: split lanes so both TCs get work ----
    if (n // nb) * n_hw == 1 and hw >= 256:
        t_split = _round_up(pl.cdiv(hw, 2), 128)
        if t_split < hw:
            t = t_split
            n_hw = pl.cdiv(hw, t)

    return nb, t, n_hw


def _abs_pow(x, p):
    """|x|**p; square-and-multiply for integer p keeps the bulk work on the VALU, off the EUP."""
    if isinstance(p, int) and p >= 1:
        if p == 1:
            return jnp.abs(x)
        base = x * x                              # == |x|**2, no abs needed
        result = jnp.abs(x) if (p % 2 == 1) else None
        e = p // 2
        while e > 0:
            if e & 1:
                result = base if result is None else result * base
            e >>= 1
            if e:
                base = base * base
        return result
    return jnp.abs(x) ** p


def _lpnorm_div_kernel(x_ref, o_ref, *, p):
    # x_ref / o_ref blocks: (Nb, C, T)
    xf = x_ref[...].astype(jnp.float32)           # f32 accumulation + bulk math (v5e: no bf16 VALU)
    if p == 2:
        inv = jax.lax.rsqrt(jnp.sum(xf * xf, axis=1, keepdims=True))         # (Nb,1,T), EUP
    elif p == 1:
        inv = 1.0 / jnp.sum(jnp.abs(xf), axis=1, keepdims=True)              # exact reciprocal
    else:
        # fused root + reciprocal: a single pow on the small (Nb,1,T) vector
        inv = jnp.sum(_abs_pow(xf, p), axis=1, keepdims=True) ** (-1.0 / p)
    # NOTE: matches PyTorch semantics exactly — no eps clamp (zero norm -> inf/nan).
    o_ref[...] = (xf * inv).astype(o_ref.dtype)   # one f32 multiply, single cast at the store


def _lpnorm_only_kernel(x_ref, o_ref, *, p):
    # x_ref block: (Nb, C, T); o_ref block: (Nb, 1, T)
    xf = x_ref[...].astype(jnp.float32)
    if p == 2:
        norm = jnp.sqrt(jnp.sum(xf * xf, axis=1, keepdims=True))
    elif p == 1:
        norm = jnp.sum(jnp.abs(xf), axis=1, keepdims=True)
    else:
        norm = jnp.sum(_abs_pow(xf, p), axis=1, keepdims=True) ** (1.0 / p)
    o_ref[...] = norm.astype(o_ref.dtype)


def lp_norm(x_nchw, p=1, return_norm=False):
    """Pallas implementation of LpNorm.forward for NCHW inputs (no eps clamp, like PyTorch)."""
    N, C, H, W = x_nchw.shape
    HW = H * W
    x = x_nchw.reshape(N, C, HW)
    itemsize = jnp.dtype(x.dtype).itemsize

    Nb, T, n_hw = _choose_tiles(N, C, HW, x.dtype, norm_only=return_norm)
    grid = (N // Nb, n_hw)

    in_spec = pl.BlockSpec((Nb, C, T), lambda i, j: (i, 0, j))
    cparams = pltpu.CompilerParams(
        dimension_semantics=("parallel", "parallel"),
        vmem_limit_bytes=_VMEM_LIMIT_BYTES,
    )

    elems = N * C * HW
    n_trans = 0 if p == 1 else N * HW             # rsqrt / pow only on the (·,1,T) vector

    if return_norm:
        cost = pl.CostEstimate(
            flops=3 * elems,
            transcendentals=n_trans,
            bytes_accessed=elems * itemsize + N * HW * itemsize,
        )
        out = pl.pallas_call(
            functools.partial(_lpnorm_only_kernel, p=p),
            out_shape=jax.ShapeDtypeStruct((N, 1, HW), x.dtype),
            grid=grid,
            in_specs=[in_spec],
            out_specs=pl.BlockSpec((Nb, 1, T), lambda i, j: (i, 0, j)),
            compiler_params=cparams,
            cost_estimate=cost,
        )(x)
        return out.reshape(N, 1, H, W)

    cost = pl.CostEstimate(
        flops=4 * elems,
        transcendentals=n_trans,
        bytes_accessed=2 * elems * itemsize,
    )
    out = pl.pallas_call(
        functools.partial(_lpnorm_div_kernel, p=p),
        out_shape=jax.ShapeDtypeStruct((N, C, HW), x.dtype),
        grid=grid,
        in_specs=[in_spec],
        out_specs=pl.BlockSpec((Nb, C, T), lambda i, j: (i, 0, j)),
        compiler_params=cparams,
        cost_estimate=cost,
    )(x)
    return out.reshape(N, C, H, W)


if __name__ == "__main__":
    key = jax.random.PRNGKey(0)
    x = jax.random.normal(key, (2, 4, 16, 16), dtype=jnp.float32)

    # Default module configuration: p=1, return_norm=False
    y = lp_norm(x, p=1, return_norm=False)
    jax.block_until_ready(y)

    # return_norm=True path (p=2)
    n = lp_norm(x, p=2, return_norm=True)
    jax.block_until_ready(n)

    # Reference checks in plain JAX
    ref_norm1 = jnp.sum(jnp.abs(x), axis=1, keepdims=True)
    ref_y = x / ref_norm1
    assert y.shape == x.shape
    assert jnp.allclose(y, ref_y, atol=1e-5, rtol=1e-5)

    ref_norm2 = jnp.sqrt(jnp.sum(x * x, axis=1, keepdims=True))
    assert n.shape == (2, 1, 16, 16)
    assert jnp.allclose(n, ref_norm2, atol=1e-5, rtol=1e-5)

    # Larger spatial extent (HW=4096) — exercises the byte-sized block selection
    key2 = jax.random.PRNGKey(1)
    x2 = jax.random.normal(key2, (2, 8, 64, 64), dtype=jnp.float32)
    y2 = lp_norm(x2, p=1, return_norm=False)
    jax.block_until_ready(y2)
    ref_y2 = x2 / jnp.sum(jnp.abs(x2), axis=1, keepdims=True)
    assert jnp.allclose(y2, ref_y2, atol=1e-5, rtol=1e-5)

    # Generic integer p (p=3) on the norm-only path (square-and-multiply branch)
    n3 = lp_norm(x2, p=3, return_norm=True)
    jax.block_until_ready(n3)
    ref_n3 = jnp.sum(jnp.abs(x2) ** 3, axis=1, keepdims=True) ** (1.0 / 3.0)
    assert jnp.allclose(n3, ref_n3, atol=1e-5, rtol=1e-4)

    # Generic p on the divide path (fused root+reciprocal branch)
    y4 = lp_norm(x2, p=4, return_norm=False)
    jax.block_until_ready(y4)
    ref_y4 = x2 / (jnp.sum(jnp.abs(x2) ** 4, axis=1, keepdims=True) ** 0.25)
    assert jnp.allclose(y4, ref_y4, atol=1e-5, rtol=1e-4)

    print("KERNEL_OK")
</pallas_src>

<mosaic_0001>
module attributes {stable_mosaic.version = 11 : i64} {
  func.func @_lpnorm_div_kernel(%arg0: i32, %arg1: i32, %arg2: memref<1x4x256xf32, #tpu.memory_space<vmem>>, %arg3: memref<1x4x256xf32, #tpu.memory_space<vmem>>) attributes {dimension_semantics = [#tpu.dimension_semantics<parallel>, #tpu.dimension_semantics<parallel>], iteration_bounds = array<i64: 2, 1>, scalar_prefetch = 0 : i64, scratch_operands = 0 : i64, tpu.core_type = #tpu.core_type<tc>, window_params = [{transform_indices = @transform_0, window_bounds = array<i64: 1, 4, 256>}, {transform_indices = @transform_1, window_bounds = array<i64: 1, 4, 256>}]} {
    %c0 = arith.constant 0 : index
    %c0_0 = arith.constant 0 : index
    %c0_1 = arith.constant 0 : index
    %0 = vector.load %arg2[%c0, %c0_0, %c0_1] : memref<1x4x256xf32, #tpu.memory_space<vmem>>, vector<1x4x256xf32>
    %1 = math.absf %0 : vector<1x4x256xf32>
    %cst = arith.constant dense<0.000000e+00> : vector<1x256xf32>
    %2 = vector.multi_reduction <add>, %1, %cst [1] : vector<1x4x256xf32> to vector<1x256xf32>
    %3 = vector.shape_cast %2 : vector<1x256xf32> to vector<1x1x256xf32>
    %cst_2 = arith.constant 1.000000e+00 : f32
    %4 = vector.broadcast %cst_2 : f32 to vector<1x1x256xf32>
    %5 = arith.divf %4, %3 : vector<1x1x256xf32>
    %6 = vector.broadcast %5 : vector<1x1x256xf32> to vector<1x4x256xf32>
    %7 = arith.mulf %0, %6 : vector<1x4x256xf32>
    %c0_3 = arith.constant 0 : index
    %c0_4 = arith.constant 0 : index
    %c0_5 = arith.constant 0 : index
    %8 = vector.load %arg3[%c0_3, %c0_4, %c0_5] : memref<1x4x256xf32, #tpu.memory_space<vmem>>, vector<1x4x256xf32>
    tpu.vector_store %arg3[%c0_3, %c0_4, %c0_5], %7 {strides = array<i32>} : memref<1x4x256xf32, #tpu.memory_space<vmem>>, vector<1x4x256xf32>,
    return
  }
  func.func @transform_0(%arg0: i32, %arg1: i32) -> (i32, i32, i32) {
    %c0_i32 = arith.constant 0 : i32
    %c0_i32_0 = arith.constant 0 : i32
    return %arg0, %c0_i32, %arg1 : i32, i32, i32
  }
  func.func @transform_1(%arg0: i32, %arg1: i32) -> (i32, i32, i32) {
    %c0_i32 = arith.constant 0 : i32
    %c0_i32_0 = arith.constant 0 : i32
    return %arg0, %c0_i32, %arg1 : i32, i32, i32
  }
}

</mosaic_0001>

<llo_original>
// kernel: tpu_custom_call.1
$region0: #{tpu_custom_call.1}
  #allocation0 [shape = 'u32[]', space=smem, size = 0x4, offset = 0x4, fixed_abs, tag = 'smem constant byte address 0x4 - core index']
  #allocation1 [shape = 'u32[144,128]{1,0:T(1,128)}', space=vmem, size = 0x12000, scoped, tag = 'internal scratch']
  %s0 = inlined_call_operand.hbm [shape: f32[2,4,256], index: 0, kind: input, shape index: {}]
  %s1 = inlined_call_operand.hbm [shape: f32[2,4,256], index: 1, kind: output, shape index: {}]
  %s2 = sld [smem:[#allocation0]]
  $region41: #{tpu_custom_call.1} parent=0
    _
  %s4 = ssub.s32 1, %s2
  %s5 = scalar_select 0, %s4, %s2
  $region1: #{tpu_custom_call.1} parent=0
    #allocation2 [shape = 'u8[8192]{0}', space=vmem, size = 0x2000, scoped, tag = 'input window, operand 0']
    #allocation3 [shape = 's32[2]{0}', space=sflag, size = 0x8, scoped, tag = 'scoped memory for tpu_custom_call.1']
    #allocation4 [shape = 's32[2]{0}', space=sflag, size = 0x8, scoped, tag = 'scoped memory for tpu_custom_call.1']
    #allocation5 [shape = 'u8[8192]{0}', space=vmem, size = 0x2000, scoped, tag = 'output window, operand 0']
    %6 = vsyncpa [#allocation3], 0
    %s7 = scalar_lea.sflag [#allocation3], 1
    %8 = vsyncpa %s7, 0
    %9 = vsyncpa [#allocation4], 0
    %s10 = scalar_lea.sflag [#allocation4], 1
    %11 = vsyncpa %s10, 0
    loop: start=0, step=1, limit=4
    $region2: #{tpu_custom_call.1} parent=1 // loop_pre_header
      _
    $region3: #{tpu_custom_call.1} parent=1 // loop_header
      %s13 = sphi 0, %s17
      %p14 = scmp.ge.s32.totalorder %s13, 4
      %s20 = sphi 0, %s32
      %s21 = sphi 0, %s28
      %s22 = sphi 0, %s20
      %s23 = sphi 0, %s21
      %s24 = sphi 0, %s22
      %s25 = sphi 0, %s23
      %s37 = sphi 0, %s39
      %s40 = sphi 0, %s37
      %s41 = sphi 0, %s40
      %s57 = sphi 0, %s41
      %s65 = sphi 0, %s67
      %s68 = sphi 0, %s65
      %s69 = sphi 0, %s68
      %s85 = sphi 0, %s69
    $region4: #{tpu_custom_call.1} parent=1 // loop_header_branch
      %16 = sbr.rel (%p14) target = $region8
    $region5: #{tpu_custom_call.1} parent=1 // loop_body
      %s18 = ssub.s32 %s13, 1
      %s19 = ssub.s32 %s13, 2
      %s26 = sadd.s32 1, %s21
      %p27 = scmp.ge.s32.totalorder %s26, 1
      %s28 = scalar_select %p27, 0, %s26
      %s29 = sadd.s32 1, %s20
      %s30 = scalar_select %p27, %s29, %s20
      %p31 = scmp.ge.s32.totalorder %s30, 2
      %s32 = scalar_select %p31, 0, %s30
      %s33 = ssub.s32 %s20, %s32
      %s34 = ssub.s32 %s21, %s28
      %s35 = sor.u32 %s33, %s34
      %p36 = scmp.eq.s32.totalorder %s35, 0
      %s38 = sadd.s32 %s37, 1
      %s39 = scalar_select %p36, %s37, %s38
      %p42 = pneg %p36
      %p43 = scmp.eq.s32.totalorder %s13, 1
      %p44 = por %p42, %p43
      %p45 = scmp.ne.s32.totalorder %s37, %s40
      %p46 = scmp.eq.s32.totalorder %s13, 0
      %p47 = por %p45, %p46
      %p48 = scmp.ne.s32.totalorder %s37, %s40
      %p49 = scmp.eq.s32.totalorder %s18, 1
      %p50 = por %p48, %p49
      %p51 = scmp.ne.s32.totalorder %s40, %s41
      %p52 = scmp.eq.s32.totalorder %s18, 0
      %p53 = por %p51, %p52
      %p54 = scmp.ne.s32.totalorder %s40, %s41
      %p55 = scmp.eq.s32.totalorder %s19, 1
      %p56 = por %p54, %p55
      %p58 = scmp.ne.s32.totalorder %s41, %s57
      %p59 = scmp.eq.s32.totalorder %s19, 0
      %p60 = por %p58, %p59
      %s61 = ssub.s32 %s20, %s32
      %s62 = ssub.s32 %s21, %s28
      %s63 = sor.u32 %s61, %s62
      %p64 = scmp.eq.s32.totalorder %s63, 0
      %s66 = sadd.s32 %s65, 1
      %s67 = scalar_select %p64, %s65, %s66
      %p70 = pneg %p64
      %p71 = scmp.eq.s32.totalorder %s13, 1
      %p72 = por %p70, %p71
      %p73 = scmp.ne.s32.totalorder %s65, %s68
      %p74 = scmp.eq.s32.totalorder %s13, 0
      %p75 = por %p73, %p74
      %p76 = scmp.ne.s32.totalorder %s65, %s68
      %p77 = scmp.eq.s32.totalorder %s18, 1
      %p78 = por %p76, %p77
      %p79 = scmp.ne.s32.totalorder %s68, %s69
      %p80 = scmp.eq.s32.totalorder %s18, 0
      %p81 = por %p79, %p80
      %p82 = scmp.ne.s32.totalorder %s68, %s69
      %p83 = scmp.eq.s32.totalorder %s19, 1
      %p84 = por %p82, %p83
      %p86 = scmp.ne.s32.totalorder %s69, %s85
      %p87 = scmp.eq.s32.totalorder %s19, 0
      %p88 = por %p86, %p87
      %p89 = scmp.le.s32.totalorder 1, %s13
      %p90 = scmp.lt.s32.totalorder %s13, 3
      %p91 = pnand %p89, %p90
      %p92 = pneg %p91
      // Predicated region
      $region9: #{tpu_custom_call.1} parent=5 // pred_check
        _
      $region10: #{tpu_custom_call.1} parent=5 // pred_check_branch
        %94 = sbr.rel (%p91) target = $region12
      $region11: #{tpu_custom_call.1} parent=5 // pred_region
        %s95 = ssub.s32 %s13, 1
      $region12: #{tpu_custom_call.1} parent=5 // pred_fallthru
        _
      %p96 = scmp.lt.s32.totalorder %s13, 2
      // Predicated region
      $region13: #{tpu_custom_call.1} parent=5 // pred_check
        %p97 = pneg %p96
      $region14: #{tpu_custom_call.1} parent=5 // pred_check_branch
        %99 = sbr.rel (%p97) target = $region16
      $region15: #{tpu_custom_call.1} parent=5 // pred_region
        // Predicated region
        $region17: #{tpu_custom_call.1} parent=15 // pred_check
          %p100 = pneg %p47
        $region18: #{tpu_custom_call.1} parent=15 // pred_check_branch
          %102 = sbr.rel (%p100) target = $region20
        $region19: #{tpu_custom_call.1} parent=15 // pred_region
          %s103 = sand.u32 %s37, 1
          %s104 = scalar_lea.sflag [#allocation3], %s103
          %s105 = sand.u32 %s37, 1
          %s106 = smul.addr %s105, 8
          %s107 = scalar_lea.vmem [#allocation2], %s106
          %s108 = smul.u32 2, %s21
          %s110 = ssub.s32 128, 128
          %111 = vsyncadd %s104, %s110
          %s112 = smul.addr %s20, 2
          %s113 = sadd.s32 %s108, %s112
          %s114 = smul.addr %s113, 64
          %s115 = scalar_lea.hbm %s0, %s114
          %s117 = sshll.u32 %s107, 4
          %s118 = int_to_ptr.vmem [resolvable:$true] %s117
          %120 = dma.hbm_to_vmem [thread:$0]  %s115, 128, %s118, %s104
        $region20: #{tpu_custom_call.1} parent=15 // pred_fallthru
          _
      $region16: #{tpu_custom_call.1} parent=5 // pred_fallthru
        _
      %p121 = scmp.le.s32.totalorder 1, %s13
      %p122 = scmp.lt.s32.totalorder %s13, 3
      %p123 = pnand %p121, %p122
      %p124 = pneg %p123
      // Predicated region
      $region21: #{tpu_custom_call.1} parent=5 // pred_check
        _
      $region22: #{tpu_custom_call.1} parent=5 // pred_check_branch
        %126 = sbr.rel (%p123) target = $region24
      $region23: #{tpu_custom_call.1} parent=5 // pred_region
        %s127 = ssub.s32 %s13, 1
        %s128 = sand.u32 %s40, 1
        %s129 = scalar_lea.sflag [#allocation3], %s128
        %s130 = sand.u32 %s40, 1
        %s131 = smul.addr %s130, 8
        %s132 = scalar_lea.vmem [#allocation2], %s131
        // Predicated region
        $region25: #{tpu_custom_call.1} parent=23 // pred_check
          %p133 = pneg %p53
        $region26: #{tpu_custom_call.1} parent=23 // pred_check_branch
          %135 = sbr.rel (%p133) target = $region28
        $region27: #{tpu_custom_call.1} parent=23 // pred_region
          %136 = dma.done %s129, 128
        $region28: #{tpu_custom_call.1} parent=23 // pred_fallthru
          _
        %s137 = sand.u32 %s40, 1
        %s138 = scalar_lea.sflag [#allocation3], %s137
        %s139 = sand.u32 %s40, 1
        %s140 = smul.addr %s139, 8
        %s141 = scalar_lea.vmem [#allocation2], %s140
        %p142 = pneg %p53
        %p143 = pneg %p50
        %p144 = pneg %p81
        %p145 = pneg %p78
        %s146 = sand.u32 %s68, 1
        %s147 = scalar_lea.sflag [#allocation4], %s146
        %s148 = sand.u32 %s68, 1
        %s149 = smul.addr %s148, 8
        %s150 = scalar_lea.vmem [#allocation5], %s149
        %s151 = smul.u32 2, %s23
        %s152 = smul.u32 2, %s23
        %v153 = vld [vmem:[%s132] sm:$0xff]
        %v154 = vand.u32 2147483647, %v153
        %v156 = vcombine.high %v154, %v154
        %vm158 = vcmask 1043456
        %v159 = vsel %vm158, %v154, 0.0
        %v160 = vrot.slane %v159, 4
        %v161 = vadd.f32 %v159, %v160
        %v162 = vrot.slane %v161, 2
        %v163 = vadd.f32 %v161, %v162
        %v164 = vrot.slane %v163, 1
        %v165 = vadd.f32 %v163, %v164
        %v166 = vsel %vm158, %v156, 0.0
        %v167 = vrot.slane %v166, 4
        %v168 = vadd.f32 %v166, %v167
        %v169 = vrot.slane %v168, 2
        %v170 = vadd.f32 %v168, %v169
        %v171 = vrot.slane %v170, 1
        %v172 = vadd.f32 %v170, %v171
        %v173 = vrcp.pop %v165
        %v174 = vmul.f32 1.0, %v173
        %v175 = vrcp.pop %v172
        %v176 = vmul.f32 1.0, %v175
        %v179 = vcombine.low %v174, %v176
        %v181 = vmul.f32 %v153, %v179
        %182 = vst [vmem:[%s150] sm:$0xff] %v181
        %s183 = sand.u32 %s68, 1
        %s184 = scalar_lea.sflag [#allocation4], %s183
        %s185 = sand.u32 %s68, 1
        %s186 = smul.addr %s185, 8
        %s187 = scalar_lea.vmem [#allocation5], %s186
        // Predicated region
        $region29: #{tpu_custom_call.1} parent=23 // pred_check
          %p188 = pneg %p78
        $region30: #{tpu_custom_call.1} parent=23 // pred_check_branch
          %190 = sbr.rel (%p188) target = $region32
        $region31: #{tpu_custom_call.1} parent=23 // pred_region
          %s191 = smul.u32 2, %s23
          %s193 = ssub.s32 128, 128
          %194 = vsyncadd %s184, %s193
          %s195 = smul.addr %s22, 2
          %s196 = sadd.s32 %s191, %s195
          %s197 = smul.addr %s196, 64
          %s198 = scalar_lea.hbm %s1, %s197
          %s200 = sshll.u32 %s187, 4
          %s201 = int_to_ptr.vmem [resolvable:$true] %s200
          %203 = dma.vmem_to_hbm [thread:$0]  %s201, 128, %s198, %s184
        $region32: #{tpu_custom_call.1} parent=23 // pred_fallthru
          _
      $region24: #{tpu_custom_call.1} parent=5 // pred_fallthru
        _
      %p204 = scmp.le.s32.totalorder 2, %s13
      // Predicated region
      $region33: #{tpu_custom_call.1} parent=5 // pred_check
        %p205 = pneg %p204
      $region34: #{tpu_custom_call.1} parent=5 // pred_check_branch
        %207 = sbr.rel (%p205) target = $region36
      $region35: #{tpu_custom_call.1} parent=5 // pred_region
        %s208 = ssub.s32 %s13, 2
        // Predicated region
        $region37: #{tpu_custom_call.1} parent=35 // pred_check
          %p209 = pneg %p84
        $region38: #{tpu_custom_call.1} parent=35 // pred_check_branch
          %211 = sbr.rel (%p209) target = $region40
        $region39: #{tpu_custom_call.1} parent=35 // pred_region
          %s212 = sand.u32 %s69, 1
          %s213 = scalar_lea.sflag [#allocation4], %s212
          %s214 = sand.u32 %s69, 1
          %s215 = smul.addr %s214, 8
          %s216 = scalar_lea.vmem [#allocation5], %s215
          %217 = dma.done %s213, 128
        $region40: #{tpu_custom_call.1} parent=35 // pred_fallthru
          _
      $region36: #{tpu_custom_call.1} parent=5 // pred_fallthru
        _
    $region6: #{tpu_custom_call.1} parent=1 // loop_footer
      %s17 = sadd.s32 1, %s13
    $region7: #{tpu_custom_call.1} parent=1 // loop_footer_branch
      %12 = sbr.rel target = $region3
    $region8: #{tpu_custom_call.1} parent=1 // loop_exit
      _
    %218 = vsyncpa [#allocation3], 1
    %s219 = scalar_lea.sflag [#allocation3], 1
    %220 = vsyncpa %s219, 1
    %221 = vsyncpa [#allocation4], 1
    %s222 = scalar_lea.sflag [#allocation4], 1
    %223 = vsyncpa %s222, 1

</llo_original>
